<compile_context>
chip_gen: v7x
topology: tpu7x:2x2x1
jax: 0.10.0
libtpu: 0.0.40
codegen_flags: <defaults>
</compile_context>

<pallas_src>
import jax
import jax.numpy as jnp
from jax.experimental import pallas as pl
from jax.experimental.pallas import tpu as pltpu

power_num = 10
C = 16
state_num = 3 * C + 2   # 50

H1 = 128
H2 = 64
OUT_PAD = 128           # lane-dense padded output width (real outputs = first 10)
MAX_TILE = 4096         # rows; ~6 MiB double-buffered (x f32 + 128-wide f32 out)


def mlp_kernel(x_ref, w1_ref, b1_ref, w2_ref, b2_ref, w3_ref, b3_ref, o_ref):
    # Fused 3-layer MLP; all weights + one batch tile resident in VMEM.
    # x is loaded as f32 and cast to bf16 in-kernel (VPU, free); matmuls
    # accumulate in f32 on the MXU; biases stay f32.
    x = x_ref[...].astype(jnp.bfloat16)                                  # [tile, 50]
    h1 = jnp.dot(x, w1_ref[...], preferred_element_type=jnp.float32) + b1_ref[...]
    h1 = jnp.maximum(h1, 0.0).astype(jnp.bfloat16)                       # F.relu
    h2 = jnp.dot(h1, w2_ref[...], preferred_element_type=jnp.float32) + b2_ref[...]
    h2 = jnp.maximum(h2, 0.0).astype(jnp.bfloat16)                       # F.relu
    out = jnp.dot(h2, w3_ref[...], preferred_element_type=jnp.float32) + b3_ref[...]
    o_ref[...] = out.astype(o_ref.dtype)                                 # [tile, 128]


def _round_up(n, m):
    return ((n + m - 1) // m) * m


def _num_tensorcores():
    # 2 TensorCores per chip on v7x (and v4 megacore); 1 on v5e / v6e.
    try:
        kind = jax.devices()[0].device_kind.lower()
    except Exception:
        return 1
    if "v7" in kind or "v4" in kind:
        return 2
    return 1


def _choose_batch_tile(B, num_tc):
    # One tile per TensorCore (grid=1 on single-TC chips, grid=2 on v7x); only
    # go to more steps when a per-core tile would exceed MAX_TILE rows.
    per_core = (B + num_tc - 1) // num_tc
    tile = _round_up(max(per_core, 1), 8)
    return min(max(tile, 8), MAX_TILE)


def prepare_params(params):
    """One-time conversion of f32 params to kernel layout.

    Returns (w1_bf16, b1_f32, w2_bf16, b2_f32, w3_bf16_padded[64,128],
    b3_f32_padded[1,128]). Call once and reuse across forward calls.
    """
    w1, b1, w2, b2, w3, b3 = params
    w1b = w1.astype(jnp.bfloat16)
    w2b = w2.astype(jnp.bfloat16)
    w3b = jnp.pad(w3.astype(jnp.bfloat16), ((0, 0), (0, OUT_PAD - power_num)))
    b3p = jnp.pad(b3, ((0, 0), (0, OUT_PAD - power_num)))
    return (w1b, b1, w2b, b2, w3b, b3p)


def net_forward(x, params, *, batch_tile=None, out_dtype=jnp.float32):
    """Pallas implementation of Net.forward. x: [B, state_num] (any float dtype).

    `params` may be raw f32 params or the output of prepare_params(); passing
    prepared params avoids per-call cast/pad ops (recommended for DQN loops).
    """
    # Accept raw params for convenience, but prefer prepare_params() upfront.
    if params[4].shape[-1] != OUT_PAD:
        params = prepare_params(params)
    w1b, b1, w2b, b2, w3b, b3p = params

    B = x.shape[0]
    if batch_tile is None:
        batch_tile = _choose_batch_tile(B, _num_tensorcores())
    batch_tile = max(8, _round_up(batch_tile, 8))

    grid_m = pl.cdiv(B, batch_tile)
    Bp = grid_m * batch_tile

    # Keep x in its original f32 layout (cast happens in-kernel); only pad the
    # batch when it is not a whole number of tiles.
    xf = x.astype(jnp.float32)
    if Bp != B:
        xf = jnp.pad(xf, ((0, Bp - B), (0, 0)))

    full = lambda arr: pl.BlockSpec(arr.shape, lambda i: (0,) * arr.ndim)

    out_padded = pl.pallas_call(
        mlp_kernel,
        out_shape=jax.ShapeDtypeStruct((Bp, OUT_PAD), out_dtype),
        grid_spec=pltpu.PrefetchScalarGridSpec(
            num_scalar_prefetch=0,
            grid=(grid_m,),
            in_specs=[
                pl.BlockSpec((batch_tile, state_num), lambda i: (i, 0)),  # x tile (f32)
                full(w1b), full(b1),
                full(w2b), full(b2),
                full(w3b), full(b3p),
            ],
            out_specs=pl.BlockSpec((batch_tile, OUT_PAD), lambda i: (i, 0)),
        ),
        compiler_params=pltpu.CompilerParams(
            dimension_semantics=("parallel",)),
    )(xf, w1b, b1, w2b, b2, w3b, b3p)

    return out_padded[:B, :power_num]


def init_params(key):
    """Deterministic parameter init (PyTorch Linear default: U(-1/sqrt(fan_in), +))."""
    dims = [(state_num, H1), (H1, H2), (H2, power_num)]
    params = []
    for (fan_in, fan_out) in dims:
        key, kw, kb = jax.random.split(key, 3)
        bound = 1.0 / jnp.sqrt(fan_in)
        w = jax.random.uniform(kw, (fan_in, fan_out), jnp.float32, -bound, bound)
        b = jax.random.uniform(kb, (1, fan_out), jnp.float32, -bound, bound)
        params += [w, b]
    return tuple(params)


def net_forward_ref(x, params):
    """Reference with the same numerics (bf16 operands, f32 accumulation)."""
    w1, b1, w2, b2, w3, b3 = params
    xb = x.astype(jnp.float32).astype(jnp.bfloat16)
    h1 = jnp.dot(xb, w1.astype(jnp.bfloat16),
                 preferred_element_type=jnp.float32) + b1
    h1 = jnp.maximum(h1, 0.0).astype(jnp.bfloat16)
    h2 = jnp.dot(h1, w2.astype(jnp.bfloat16),
                 preferred_element_type=jnp.float32) + b2
    h2 = jnp.maximum(h2, 0.0).astype(jnp.bfloat16)
    return jnp.dot(h2, w3.astype(jnp.bfloat16),
                   preferred_element_type=jnp.float32) + b3


if __name__ == "__main__":
    key = jax.random.PRNGKey(0)
    kp, kx1, kx2 = jax.random.split(key, 3)
    raw_params = init_params(kp)
    params = prepare_params(raw_params)   # one-time bf16 cast + lane padding

    # Small, tile-aligned batch (grid=1 on every generation).
    B1 = 8
    x1 = jax.random.normal(kx1, (B1, state_num), dtype=jnp.float32)
    out1 = jax.block_until_ready(net_forward(x1, params))
    ref1 = net_forward_ref(x1, raw_params)
    assert out1.shape == (B1, power_num)
    assert jnp.allclose(out1, ref1, atol=1e-2, rtol=1e-2)

    # Arbitrary batch (exercises cdiv grid + zero-padded tail; on v7x this
    # splits into 2 parallel tiles, on v5e/v6e it stays a single tile).
    B2 = 100
    x2 = jax.random.normal(kx2, (B2, state_num), dtype=jnp.float32)
    out2 = jax.block_until_ready(net_forward(x2, params))
    ref2 = net_forward_ref(x2, raw_params)
    assert out2.shape == (B2, power_num)
    assert jnp.allclose(out2, ref2, atol=1e-2, rtol=1e-2)

    # Exercise the multi-step path explicitly (forced small tile) + raw params.
    out3 = jax.block_until_ready(net_forward(x2, raw_params, batch_tile=32))
    assert jnp.allclose(out3, ref2, atol=1e-2, rtol=1e-2)

    print("KERNEL_OK")
</pallas_src>

<mosaic_0001>
module attributes {stable_mosaic.version = 11 : i64} {
  func.func @mlp_kernel(%arg0: i32, %arg1: memref<8x50xf32, #tpu.memory_space<vmem>>, %arg2: memref<50x128xbf16, #tpu.memory_space<vmem>>, %arg3: memref<1x128xf32, #tpu.memory_space<vmem>>, %arg4: memref<128x64xbf16, #tpu.memory_space<vmem>>, %arg5: memref<1x64xf32, #tpu.memory_space<vmem>>, %arg6: memref<64x128xbf16, #tpu.memory_space<vmem>>, %arg7: memref<1x128xf32, #tpu.memory_space<vmem>>, %arg8: memref<8x128xf32, #tpu.memory_space<vmem>>) attributes {dimension_semantics = [#tpu.dimension_semantics<parallel>], iteration_bounds = array<i64: 1>, scalar_prefetch = 0 : i64, scratch_operands = 0 : i64, tpu.core_type = #tpu.core_type<tc>, window_params = [{transform_indices = @transform_0, window_bounds = array<i64: 8, 50>}, {pipeline_mode = #tpu.pipeline_mode<synchronous>, transform_indices = @transform_1, window_bounds = array<i64: 50, 128>}, {pipeline_mode = #tpu.pipeline_mode<synchronous>, transform_indices = @transform_2, window_bounds = array<i64: 1, 128>}, {pipeline_mode = #tpu.pipeline_mode<synchronous>, transform_indices = @transform_3, window_bounds = array<i64: 128, 64>}, {pipeline_mode = #tpu.pipeline_mode<synchronous>, transform_indices = @transform_4, window_bounds = array<i64: 1, 64>}, {pipeline_mode = #tpu.pipeline_mode<synchronous>, transform_indices = @transform_5, window_bounds = array<i64: 64, 128>}, {pipeline_mode = #tpu.pipeline_mode<synchronous>, transform_indices = @transform_6, window_bounds = array<i64: 1, 128>}, {transform_indices = @transform_7, window_bounds = array<i64: 8, 128>}]} {
    %c0 = arith.constant 0 : index
    %c0_0 = arith.constant 0 : index
    %0 = vector.load %arg1[%c0, %c0_0] : memref<8x50xf32, #tpu.memory_space<vmem>>, vector<8x50xf32>
    %1 = arith.truncf %0 : vector<8x50xf32> to vector<8x50xbf16>
    %c0_1 = arith.constant 0 : index
    %c0_2 = arith.constant 0 : index
    %2 = vector.load %arg2[%c0_1, %c0_2] : memref<50x128xbf16, #tpu.memory_space<vmem>>, vector<50x128xbf16>
    %cst = arith.constant dense<0.000000e+00> : vector<8x128xf32>
    %3 = tpu.matmul %1, %2, %cst {dimension_numbers = #tpu.dot_dimension_numbers<[1], [0], [0], [1], [0, 0, 1, 1], [], []>} : vector<8x50xbf16>, vector<50x128xbf16>, vector<8x128xf32> -> vector<8x128xf32>
    %c0_3 = arith.constant 0 : index
    %c0_4 = arith.constant 0 : index
    %4 = vector.load %arg3[%c0_3, %c0_4] : memref<1x128xf32, #tpu.memory_space<vmem>>, vector<1x128xf32>
    %5 = vector.broadcast %4 : vector<1x128xf32> to vector<8x128xf32>
    %6 = arith.addf %3, %5 : vector<8x128xf32>
    %cst_5 = arith.constant 0.000000e+00 : f32
    %7 = vector.broadcast %cst_5 : f32 to vector<8x128xf32>
    %8 = arith.maximumf %6, %7 : vector<8x128xf32>
    %9 = arith.truncf %8 : vector<8x128xf32> to vector<8x128xbf16>
    %c0_6 = arith.constant 0 : index
    %c0_7 = arith.constant 0 : index
    %10 = vector.load %arg4[%c0_6, %c0_7] : memref<128x64xbf16, #tpu.memory_space<vmem>>, vector<128x64xbf16>
    %cst_8 = arith.constant dense<0.000000e+00> : vector<8x64xf32>
    %11 = tpu.matmul %9, %10, %cst_8 {dimension_numbers = #tpu.dot_dimension_numbers<[1], [0], [0], [1], [0, 0, 1, 1], [], []>} : vector<8x128xbf16>, vector<128x64xbf16>, vector<8x64xf32> -> vector<8x64xf32>
    %c0_9 = arith.constant 0 : index
    %c0_10 = arith.constant 0 : index
    %12 = vector.load %arg5[%c0_9, %c0_10] : memref<1x64xf32, #tpu.memory_space<vmem>>, vector<1x64xf32>
    %13 = vector.broadcast %12 : vector<1x64xf32> to vector<8x64xf32>
    %14 = arith.addf %11, %13 : vector<8x64xf32>
    %cst_11 = arith.constant 0.000000e+00 : f32
    %15 = vector.broadcast %cst_11 : f32 to vector<8x64xf32>
    %16 = arith.maximumf %14, %15 : vector<8x64xf32>
    %17 = arith.truncf %16 : vector<8x64xf32> to vector<8x64xbf16>
    %c0_12 = arith.constant 0 : index
    %c0_13 = arith.constant 0 : index
    %18 = vector.load %arg6[%c0_12, %c0_13] : memref<64x128xbf16, #tpu.memory_space<vmem>>, vector<64x128xbf16>
    %cst_14 = arith.constant dense<0.000000e+00> : vector<8x128xf32>
    %19 = tpu.matmul %17, %18, %cst_14 {dimension_numbers = #tpu.dot_dimension_numbers<[1], [0], [0], [1], [0, 0, 1, 1], [], []>} : vector<8x64xbf16>, vector<64x128xbf16>, vector<8x128xf32> -> vector<8x128xf32>
    %c0_15 = arith.constant 0 : index
    %c0_16 = arith.constant 0 : index
    %20 = vector.load %arg7[%c0_15, %c0_16] : memref<1x128xf32, #tpu.memory_space<vmem>>, vector<1x128xf32>
    %21 = vector.broadcast %20 : vector<1x128xf32> to vector<8x128xf32>
    %22 = arith.addf %19, %21 : vector<8x128xf32>
    %c0_17 = arith.constant 0 : index
    %c0_18 = arith.constant 0 : index
    %23 = vector.load %arg8[%c0_17, %c0_18] : memref<8x128xf32, #tpu.memory_space<vmem>>, vector<8x128xf32>
    tpu.vector_store %arg8[%c0_17, %c0_18], %22 {strides = array<i32>} : memref<8x128xf32, #tpu.memory_space<vmem>>, vector<8x128xf32>,
    return
  }
  func.func @transform_0(%arg0: i32) -> (i32, i32) {
    %c0_i32 = arith.constant 0 : i32
    %c0_i32_0 = arith.constant 0 : i32
    return %arg0, %c0_i32 : i32, i32
  }
  func.func @transform_1(%arg0: i32) -> (i32, i32) {
    %c0_i32 = arith.constant 0 : i32
    %c0_i32_0 = arith.constant 0 : i32
    %c0_i32_1 = arith.constant 0 : i32
    return %c0_i32, %c0_i32_0 : i32, i32
  }
  func.func @transform_2(%arg0: i32) -> (i32, i32) {
    %c0_i32 = arith.constant 0 : i32
    %c0_i32_0 = arith.constant 0 : i32
    %c0_i32_1 = arith.constant 0 : i32
    return %c0_i32, %c0_i32_0 : i32, i32
  }
  func.func @transform_3(%arg0: i32) -> (i32, i32) {
    %c0_i32 = arith.constant 0 : i32
    %c0_i32_0 = arith.constant 0 : i32
    %c0_i32_1 = arith.constant 0 : i32
    return %c0_i32, %c0_i32_0 : i32, i32
  }
  func.func @transform_4(%arg0: i32) -> (i32, i32) {
    %c0_i32 = arith.constant 0 : i32
    %c0_i32_0 = arith.constant 0 : i32
    %c0_i32_1 = arith.constant 0 : i32
    return %c0_i32, %c0_i32_0 : i32, i32
  }
  func.func @transform_5(%arg0: i32) -> (i32, i32) {
    %c0_i32 = arith.constant 0 : i32
    %c0_i32_0 = arith.constant 0 : i32
    %c0_i32_1 = arith.constant 0 : i32
    return %c0_i32, %c0_i32_0 : i32, i32
  }
  func.func @transform_6(%arg0: i32) -> (i32, i32) {
    %c0_i32 = arith.constant 0 : i32
    %c0_i32_0 = arith.constant 0 : i32
    %c0_i32_1 = arith.constant 0 : i32
    return %c0_i32, %c0_i32_0 : i32, i32
  }
  func.func @transform_7(%arg0: i32) -> (i32, i32) {
    %c0_i32 = arith.constant 0 : i32
    %c0_i32_0 = arith.constant 0 : i32
    return %arg0, %c0_i32 : i32, i32
  }
}

</mosaic_0001>

<llo_original>
// kernel: tpu_custom_call.1
$region0: #{tpu_custom_call.1}
  #allocation0 [shape = 'u32[]', space=smem, size = 0x4, offset = 0x4, fixed_abs, tag = 'smem constant byte address 0x4 - core index']
  #allocation1 [shape = 'u32[144,128]{1,0:T(1,128)}', space=vmem, size = 0x12000, scoped, tag = 'internal scratch']
  %s0 = inlined_call_operand.vmem [shape: f32[8,50], index: 0, kind: input, shape index: {}]
  %s1 = inlined_call_operand.vmem [shape: bf16[50,128], index: 1, kind: input, shape index: {}]
  %s2 = inlined_call_operand.vmem [shape: f32[1,128], index: 2, kind: input, shape index: {}]
  %s3 = inlined_call_operand.vmem [shape: bf16[128,64], index: 3, kind: input, shape index: {}]
  %s4 = inlined_call_operand.vmem [shape: f32[1,64], index: 4, kind: input, shape index: {}]
  %s5 = inlined_call_operand.vmem [shape: bf16[64,128], index: 5, kind: input, shape index: {}]
  %s6 = inlined_call_operand.vmem [shape: f32[1,128], index: 6, kind: input, shape index: {}]
  %s7 = inlined_call_operand.hbm [shape: f32[8,128], index: 7, kind: output, shape index: {}]
  %s8 = sld [smem:[#allocation0]]
  $region38: #{tpu_custom_call.1} parent=0
    _
  %s10 = ssub.s32 1, %s8
  %s11 = scalar_select 0, %s10, %s8
  $region1: #{tpu_custom_call.1} parent=0
    #allocation2 [shape = 'u8[4096]{0}', space=vmem, size = 0x1000, scoped, tag = 'output window, operand 0, single buffered']
    #allocation3 [shape = 's32[1]{0}', space=sflag, size = 0x4, scoped, tag = 'scoped memory for tpu_custom_call.1']
    %12 = vsyncpa [#allocation3], 0
    // Predicated region
    $region2: #{tpu_custom_call.1} parent=1 // pred_check
      _
    $region3: #{tpu_custom_call.1} parent=1 // pred_check_branch
      %14 = sbr.rel (0) target = $region5
    $region4: #{tpu_custom_call.1} parent=1 // pred_region
      _
    $region5: #{tpu_custom_call.1} parent=1 // pred_fallthru
      _
    // Predicated region
    $region6: #{tpu_custom_call.1} parent=1 // pred_check
      _
    $region7: #{tpu_custom_call.1} parent=1 // pred_check_branch
      %16 = sbr.rel (0) target = $region9
    $region8: #{tpu_custom_call.1} parent=1 // pred_region
      _
    $region9: #{tpu_custom_call.1} parent=1 // pred_fallthru
      _
    // Predicated region
    $region10: #{tpu_custom_call.1} parent=1 // pred_check
      _
    $region11: #{tpu_custom_call.1} parent=1 // pred_check_branch
      %18 = sbr.rel (0) target = $region13
    $region12: #{tpu_custom_call.1} parent=1 // pred_region
      _
    $region13: #{tpu_custom_call.1} parent=1 // pred_fallthru
      _
    // Predicated region
    $region14: #{tpu_custom_call.1} parent=1 // pred_check
      _
    $region15: #{tpu_custom_call.1} parent=1 // pred_check_branch
      %20 = sbr.rel (0) target = $region17
    $region16: #{tpu_custom_call.1} parent=1 // pred_region
      _
    $region17: #{tpu_custom_call.1} parent=1 // pred_fallthru
      _
    // Predicated region
    $region18: #{tpu_custom_call.1} parent=1 // pred_check
      _
    $region19: #{tpu_custom_call.1} parent=1 // pred_check_branch
      %22 = sbr.rel (0) target = $region21
    $region20: #{tpu_custom_call.1} parent=1 // pred_region
      _
    $region21: #{tpu_custom_call.1} parent=1 // pred_fallthru
      _
    // Predicated region
    $region22: #{tpu_custom_call.1} parent=1 // pred_check
      _
    $region23: #{tpu_custom_call.1} parent=1 // pred_check_branch
      %24 = sbr.rel (0) target = $region25
    $region24: #{tpu_custom_call.1} parent=1 // pred_region
      _
    $region25: #{tpu_custom_call.1} parent=1 // pred_fallthru
      _
    // Predicated region
    $region26: #{tpu_custom_call.1} parent=1 // pred_check
      _
    $region27: #{tpu_custom_call.1} parent=1 // pred_check_branch
      %26 = sbr.rel (0) target = $region29
    $region28: #{tpu_custom_call.1} parent=1 // pred_region
      _
    $region29: #{tpu_custom_call.1} parent=1 // pred_fallthru
      _
    %v28 = vld [vmem:[%s0] sm:$0xff]
    %v29 = vpack.c.bf16 %v28, %v28
    %v30 = vld [vmem:[%s1] sm:$0xf]
    %v31 = vld [vmem:[%s1 + $0x4] sm:$0xf]
    %v32 = vld [vmem:[%s1 + $0x8] sm:$0xf]
    %v33 = vld [vmem:[%s1 + $0xc] sm:$0xf]
    %v34 = vld [vmem:[%s1 + $0x10] sm:$0xf]
    %v35 = vld [vmem:[%s1 + $0x14] sm:$0xf]
    %v36 = vld [vmem:[%s1 + $0x18] sm:$0x1]
    %v37 = vld [vmem:[%s2] sm:$0x1]
    %v39 = vlaneseq
    %v40 = vshrl.u32 %v39, 7
    %v41 = vsub.s32 0, %v40
    %v42 = vrot.slane %v37, %v41
    %v51 = vunpack.c.l.b16 %v30
    %v52 = vunpack.c.l.b16 %v31
    %v53 = vunpack.c.l.b16 %v32
    %v54 = vunpack.c.l.b16 %v33
    %v55 = vunpack.c.l.b16 %v34
    %v56 = vunpack.c.l.b16 %v35
    %v57 = vunpack.c.l.b16 %v36
    %v58 = vpack.c.b16 %v52, %v51
    %v59 = vpack.c.b16 %v54, %v53
    %v60 = vpack.c.b16 %v56, %v55
    %v61 = vpack.c.b16 %v57, %v57
    %vm65 = vcmask 408576
    %v67 = vsel %vm65, %v29, 0
    %vm69 = vcmask 1040384
    %v71 = vsel %vm69, %v61, 0
    %73 = vmatprep.subr.bf16.mxu0 0
    %74 = vmatpush1.bf16.msra.mxu0 %v58
    %75 = vmatprep.subr.bf16.mxu0 0
    %76 = vmatpush1.bf16.msra.mxu0 %v59
    %77 = vmatprep.subr.bf16.mxu0 0
    %78 = vmatpush1.bf16.msra.mxu0 %v60
    %79 = vmatprep.subr.bf16.mxu0 0
    %80 = vmatpush1.bf16.msra.mxu0 %v71
    %81 = vmatprep.subr.bf16.mxu0 0
    %82 = vmatpush1.bf16.msra.mxu0 0
    %83 = vmatprep.subr.bf16.mxu0 0
    %84 = vmatpush1.bf16.msra.mxu0 0
    %85 = vmatprep.subr.bf16.mxu0 0
    %86 = vmatpush1.bf16.msra.mxu0 0
    %87 = vmatprep.subr.bf16.mxu0 0
    %88 = vmatpush1.bf16.msra.mxu0 0
    %89 = vmatprep.subr.bf16.mxu0 0
    %90 = vmatpush1.bf16.msra.mxu0 0
    %91 = vmatprep.subr.bf16.mxu0 0
    %92 = vmatpush1.bf16.msra.mxu0 0
    %93 = vmatprep.subr.bf16.mxu0 0
    %94 = vmatpush1.bf16.msra.mxu0 0
    %95 = vmatprep.subr.bf16.mxu0 0
    %96 = vmatpush1.bf16.msra.mxu0 0
    %97 = vmatprep.subr.bf16.mxu0 0
    %98 = vmatpush1.bf16.msra.mxu0 0
    %99 = vmatprep.subr.bf16.mxu0 0
    %100 = vmatpush1.bf16.msra.mxu0 0
    %101 = vmatprep.subr.bf16.mxu0 0
    %102 = vmatpush1.bf16.msra.mxu0 0
    %103 = vmatprep.subr.bf16.mxu0 0
    %104 = vmatpush1.bf16.msra.mxu0 0
    %105 = vmatprep.mubr.bf16.mxu0 0
    %106 = vmatmul.mubr.bf16.gmra.mrb[0].mxu0 %v67
    %v107 = vpop.f32.mrb[0].mxu0
    %v108 = vadd.f32 %v42, %v107
    %v109 = vpop.f32.mrb[0].mxu0
    %v110 = vpop.f32.mrb[0].mxu0
    %v111 = vpop.f32.mrb[0].mxu0
    %112 = vdwg.mxu0
    %v113 = vmax.f32 %v108, 0.0
    %v114 = vpack.c.bf16 %v113, %v113
    %v115 = vld [vmem:[%s3] sm:$0xf]
    %v116 = vld [vmem:[%s3 + $0x4] sm:$0xf]
    %v117 = vld [vmem:[%s3 + $0x8] sm:$0xf]
    %v118 = vld [vmem:[%s3 + $0xc] sm:$0xf]
    %v119 = vld [vmem:[%s3 + $0x10] sm:$0xf]
    %v120 = vld [vmem:[%s3 + $0x14] sm:$0xf]
    %v121 = vld [vmem:[%s3 + $0x18] sm:$0xf]
    %v122 = vld [vmem:[%s3 + $0x1c] sm:$0xf]
    %v123 = vld [vmem:[%s3 + $0x20] sm:$0xf]
    %v124 = vld [vmem:[%s3 + $0x24] sm:$0xf]
    %v125 = vld [vmem:[%s3 + $0x28] sm:$0xf]
    %v126 = vld [vmem:[%s3 + $0x2c] sm:$0xf]
    %v127 = vld [vmem:[%s3 + $0x30] sm:$0xf]
    %v128 = vld [vmem:[%s3 + $0x34] sm:$0xf]
    %v129 = vld [vmem:[%s3 + $0x38] sm:$0xf]
    %v130 = vld [vmem:[%s3 + $0x3c] sm:$0xf]
    %v131 = vld [vmem:[%s4] sm:$0x1]
    %v133 = vlaneseq
    %v134 = vshrl.u32 %v133, 7
    %v135 = vsub.s32 0, %v134
    %v136 = vrot.slane %v131, %v135
    %v154 = vunpack.c.l.b16 %v115
    %v155 = vunpack.c.l.b16 %v116
    %v156 = vunpack.c.l.b16 %v117
    %v157 = vunpack.c.l.b16 %v118
    %v158 = vunpack.c.l.b16 %v119
    %v159 = vunpack.c.l.b16 %v120
    %v160 = vunpack.c.l.b16 %v121
    %v161 = vunpack.c.l.b16 %v122
    %v162 = vunpack.c.l.b16 %v123
    %v163 = vunpack.c.l.b16 %v124
    %v164 = vunpack.c.l.b16 %v125
    %v165 = vunpack.c.l.b16 %v126
    %v166 = vunpack.c.l.b16 %v127
    %v167 = vunpack.c.l.b16 %v128
    %v168 = vunpack.c.l.b16 %v129
    %v169 = vunpack.c.l.b16 %v130
    %v170 = vpack.c.b16 %v155, %v154
    %v171 = vpack.c.b16 %v157, %v156
    %v172 = vpack.c.b16 %v159, %v158
    %v173 = vpack.c.b16 %v161, %v160
    %v174 = vpack.c.b16 %v163, %v162
    %v175 = vpack.c.b16 %v165, %v164
    %v176 = vpack.c.b16 %v167, %v166
    %v177 = vpack.c.b16 %v169, %v168
    %186 = vmatprep.subr.bf16.mxu0 0
    %187 = vmatpush1.bf16.msra.mxu0 %v170
    %188 = vmatprep.subr.bf16.mxu0 0
    %189 = vmatpush1.bf16.msra.mxu0 %v171
    %190 = vmatprep.subr.bf16.mxu0 0
    %191 = vmatpush1.bf16.msra.mxu0 %v172
    %192 = vmatprep.subr.bf16.mxu0 0
    %193 = vmatpush1.bf16.msra.mxu0 %v173
    %194 = vmatprep.subr.bf16.mxu0 0
    %195 = vmatpush1.bf16.msra.mxu0 %v174
    %196 = vmatprep.subr.bf16.mxu0 0
    %197 = vmatpush1.bf16.msra.mxu0 %v175
    %198 = vmatprep.subr.bf16.mxu0 0
    %199 = vmatpush1.bf16.msra.mxu0 %v176
    %200 = vmatprep.subr.bf16.mxu0 0
    %201 = vmatpush1.bf16.msra.mxu0 %v177
    %202 = vmatprep.subr.bf16.mxu0 0
    %203 = vmatpush1.bf16.msra.mxu0 0
    %204 = vmatprep.subr.bf16.mxu0 0
    %205 = vmatpush1.bf16.msra.mxu0 0
    %206 = vmatprep.subr.bf16.mxu0 0
    %207 = vmatpush1.bf16.msra.mxu0 0
    %208 = vmatprep.subr.bf16.mxu0 0
    %209 = vmatpush1.bf16.msra.mxu0 0
    %210 = vmatprep.subr.bf16.mxu0 0
    %211 = vmatpush1.bf16.msra.mxu0 0
    %212 = vmatprep.subr.bf16.mxu0 0
    %213 = vmatpush1.bf16.msra.mxu0 0
    %214 = vmatprep.subr.bf16.mxu0 0
    %215 = vmatpush1.bf16.msra.mxu0 0
    %216 = vmatprep.subr.bf16.mxu0 0
    %217 = vmatpush1.bf16.msra.mxu0 0
    %218 = vmatprep.mubr.bf16.mxu0 0
    %219 = vmatmul.mubr.bf16.gmra.mrb[0].mxu0 %v114
    %v220 = vpop.f32.mrb[0].mxu0
    %v221 = vadd.f32 %v136, %v220
    %v222 = vpop.f32.mrb[0].mxu0
    %v223 = vpop.f32.mrb[0].mxu0
    %v224 = vpop.f32.mrb[0].mxu0
    %225 = vdwg.mxu0
    %v226 = vmax.f32 %v221, 0.0
    %v227 = vpack.c.bf16 %v226, %v226
    %v228 = vld [vmem:[%s5] sm:$0xf]
    %v229 = vld [vmem:[%s5 + $0x4] sm:$0xf]
    %v230 = vld [vmem:[%s5 + $0x8] sm:$0xf]
    %v231 = vld [vmem:[%s5 + $0xc] sm:$0xf]
    %v232 = vld [vmem:[%s5 + $0x10] sm:$0xf]
    %v233 = vld [vmem:[%s5 + $0x14] sm:$0xf]
    %v234 = vld [vmem:[%s5 + $0x18] sm:$0xf]
    %v235 = vld [vmem:[%s5 + $0x1c] sm:$0xf]
    %v236 = vld [vmem:[%s6] sm:$0x1]
    %v238 = vlaneseq
    %v239 = vshrl.u32 %v238, 7
    %v240 = vsub.s32 0, %v239
    %v241 = vrot.slane %v236, %v240
    %v251 = vunpack.c.l.b16 %v228
    %v252 = vunpack.c.l.b16 %v229
    %v253 = vunpack.c.l.b16 %v230
    %v254 = vunpack.c.l.b16 %v231
    %v255 = vunpack.c.l.b16 %v232
    %v256 = vunpack.c.l.b16 %v233
    %v257 = vunpack.c.l.b16 %v234
    %v258 = vunpack.c.l.b16 %v235
    %v259 = vpack.c.b16 %v252, %v251
    %v260 = vpack.c.b16 %v254, %v253
    %v261 = vpack.c.b16 %v256, %v255
    %v262 = vpack.c.b16 %v258, %v257
    %vm267 = vcmask 523264
    %v269 = vsel %vm267, %v227, 0
    %271 = vmatprep.subr.bf16.mxu0 0
    %272 = vmatpush1.bf16.msra.mxu0 %v259
    %273 = vmatprep.subr.bf16.mxu0 0
    %274 = vmatpush1.bf16.msra.mxu0 %v260
    %275 = vmatprep.subr.bf16.mxu0 0
    %276 = vmatpush1.bf16.msra.mxu0 %v261
    %277 = vmatprep.subr.bf16.mxu0 0
    %278 = vmatpush1.bf16.msra.mxu0 %v262
    %279 = vmatprep.subr.bf16.mxu0 0
    %280 = vmatpush1.bf16.msra.mxu0 0
    %281 = vmatprep.subr.bf16.mxu0 0
    %282 = vmatpush1.bf16.msra.mxu0 0
    %283 = vmatprep.subr.bf16.mxu0 0
    %284 = vmatpush1.bf16.msra.mxu0 0
    %285 = vmatprep.subr.bf16.mxu0 0
    %286 = vmatpush1.bf16.msra.mxu0 0
    %287 = vmatprep.subr.bf16.mxu0 0
    %288 = vmatpush1.bf16.msra.mxu0 0
    %289 = vmatprep.subr.bf16.mxu0 0
    %290 = vmatpush1.bf16.msra.mxu0 0
    %291 = vmatprep.subr.bf16.mxu0 0
    %292 = vmatpush1.bf16.msra.mxu0 0
    %293 = vmatprep.subr.bf16.mxu0 0
    %294 = vmatpush1.bf16.msra.mxu0 0
    %295 = vmatprep.subr.bf16.mxu0 0
    %296 = vmatpush1.bf16.msra.mxu0 0
    %297 = vmatprep.subr.bf16.mxu0 0
    %298 = vmatpush1.bf16.msra.mxu0 0
    %299 = vmatprep.subr.bf16.mxu0 0
    %300 = vmatpush1.bf16.msra.mxu0 0
    %301 = vmatprep.subr.bf16.mxu0 0
    %302 = vmatpush1.bf16.msra.mxu0 0
    %303 = vmatprep.mubr.bf16.mxu0 0
    %304 = vmatmul.mubr.bf16.gmra.mrb[0].mxu0 %v269
    %v305 = vpop.f32.mrb[0].mxu0
    %v306 = vadd.f32 %v241, %v305
    %v307 = vpop.f32.mrb[0].mxu0
    %v308 = vpop.f32.mrb[0].mxu0
    %v309 = vpop.f32.mrb[0].mxu0
    %310 = vdwg.mxu0
    %311 = vst [vmem:[#allocation2] sm:$0xff] %v306
    // Predicated region
    $region30: #{tpu_custom_call.1} parent=1 // pred_check
      _
    $region31: #{tpu_custom_call.1} parent=1 // pred_check_branch
      %313 = sbr.rel (0) target = $region33
    $region32: #{tpu_custom_call.1} parent=1 // pred_region
      %s315 = ssub.s32 128, 128
      %316 = vsyncadd [#allocation3], %s315
      %s318 = sshll.u32 [#allocation2], 4
      %s319 = int_to_ptr.vmem [resolvable:$true] %s318
      %321 = dma.vmem_to_hbm [thread:$0]  %s319, 128, %s7, [#allocation3]
    $region33: #{tpu_custom_call.1} parent=1 // pred_fallthru
      _
    // Predicated region
    $region34: #{tpu_custom_call.1} parent=1 // pred_check
      _
    $region35: #{tpu_custom_call.1} parent=1 // pred_check_branch
      %323 = sbr.rel (0) target = $region37
    $region36: #{tpu_custom_call.1} parent=1 // pred_region
      %324 = dma.done [#allocation3], 128
    $region37: #{tpu_custom_call.1} parent=1 // pred_fallthru
      _
    %325 = vsyncpa [#allocation3], 1

</llo_original>
